<compile_context>
chip_gen: v7x
topology: tpu7x:2x2x1
jax: 0.10.0
libtpu: 0.0.40
codegen_flags: <defaults>
</compile_context>

<pallas_src>
import functools

import jax
import jax.numpy as jnp
from jax.experimental import pallas as pl
from jax.experimental.pallas import tpu as pltpu


IN_DIMS = (128, 128)                 # two input views
HID = 128                            # hidden dim
MID = (len(IN_DIMS) * HID) // 2      # 128
OUT = 1
F_IN = sum(IN_DIMS)                  # 256


def nn_kernel(x_ref,
              wa_ref, ba_ref,        # fused branch layer 1: (256,256), (1,256)
              wb_ref, bb_ref,        # fused branch layer 2: (256,256), (1,256)
              w3a_ref, b3a_ref,      # 256 -> 128
              w3b_ref, b3b_ref,      # 128 -> 32
              w3c_ref, b3c_ref,      # final row (1,32), (1,1)
              o_ref,
              *, compute_dtype, act_dtype):
    # In-kernel cast: x is read from HBM as f32 once; no wrapper pre-pass.
    x = x_ref[...].astype(compute_dtype)                 # (tb, 256)

    # Fused branches: block-diagonal weights == two independent 128-wide MLPs
    # computed as a single 256-wide matmul (no concat needed afterwards).
    # Bias-add + tanh in act_dtype (bf16 on v6e/v7x, f32 on v5e).
    h = jnp.dot(x, wa_ref[...], preferred_element_type=jnp.float32)
    h = jnp.tanh(h.astype(act_dtype) + ba_ref[...])
    h = jnp.dot(h.astype(compute_dtype), wb_ref[...],
                preferred_element_type=jnp.float32)
    h = jnp.tanh(h.astype(act_dtype) + bb_ref[...])

    # project3: Linear(256,128) -> Tanh -> Linear(128,32) -> Tanh -> Linear(32,1)
    h = jnp.dot(h.astype(compute_dtype), w3a_ref[...],
                preferred_element_type=jnp.float32)
    h = jnp.tanh(h.astype(act_dtype) + b3a_ref[...])
    h = jnp.dot(h.astype(compute_dtype), w3b_ref[...],
                preferred_element_type=jnp.float32)
    h = jnp.tanh(h.astype(act_dtype) + b3b_ref[...])

    # Final 32 -> 1 as a VPU/XLU reduction (avoids an N=1, K=32 MXU push/pop).
    o_ref[...] = (jnp.sum(h.astype(jnp.float32) * w3c_ref[...],
                          axis=-1, keepdims=True) + b3c_ref[...])


def _block_diag(a, b):
    m0, n0 = a.shape
    m1, n1 = b.shape
    top = jnp.concatenate([a, jnp.zeros((m0, n1), a.dtype)], axis=1)
    bot = jnp.concatenate([jnp.zeros((m1, n0), b.dtype), b], axis=1)
    return jnp.concatenate([top, bot], axis=0)


def prepare_params(params, compute_dtype, act_dtype):
    """Fuse the two branch MLPs into block-diagonal weights; matmul operands in
    compute_dtype, biases in act_dtype, final row/bias in f32."""
    (w0a, b0a, w0b, b0b, w1a, b1a, w1b, b1b,
     w3a, b3a, w3b, b3b, w3c, b3c) = params
    wa = _block_diag(w0a, w1a).astype(compute_dtype)
    ba = jnp.concatenate([b0a, b1a], axis=1).astype(act_dtype)
    wb = _block_diag(w0b, w1b).astype(compute_dtype)
    bb = jnp.concatenate([b0b, b1b], axis=1).astype(act_dtype)
    return (wa, ba, wb, bb,
            w3a.astype(compute_dtype), b3a.astype(act_dtype),
            w3b.astype(compute_dtype), b3b.astype(act_dtype),
            w3c.reshape(1, -1).astype(jnp.float32),      # (1, 32) VPU row
            b3c.reshape(1, OUT).astype(jnp.float32))


def _round_up(n, m):
    return ((n + m - 1) // m) * m


def _choose_tile(B, mult, cap, two_cores):
    tb = min(cap, _round_up(B, mult))
    # Only on 2-TensorCore chips (v7x) is there a benefit from >= 2 grid steps.
    if two_cores and B > 2 * mult and pl.cdiv(B, tb) < 2:
        tb = _round_up(pl.cdiv(B, 2), mult)
    if tb >= B:
        tb = B            # single full-extent block — always a legal BlockSpec
    return tb


def nn_forward(x, params, *, tb=None, compute_dtype=None, act_dtype=None):
    """x: (B, 256) float32 -> (B, 1) float32."""
    B, F = x.shape
    assert F == F_IN

    kind = jax.devices()[0].device_kind.lower()
    bf16_elementwise_ok = any(t in kind for t in ("v6", "v7", "7x"))
    two_cores = ("v7" in kind) or ("7x" in kind)

    if compute_dtype is None:
        compute_dtype = jnp.bfloat16          # MXU operand dtype
    if act_dtype is None:
        # bf16 bias-add/tanh only where the VPU/EUP are bf16-capable.
        act_dtype = (jnp.bfloat16
                     if (bf16_elementwise_ok and compute_dtype == jnp.bfloat16)
                     else jnp.float32)

    if tb is None:
        mult = 16 if compute_dtype == jnp.bfloat16 else 8
        tb = _choose_tile(B, mult, 2048, two_cores)
    assert tb == B or tb % 8 == 0

    fused = prepare_params(params, compute_dtype, act_dtype)

    # Constant index maps keep all weights VMEM-resident across the grid
    # (Pallas skips re-DMA when the block index does not change).
    weight_specs = [
        pl.BlockSpec(p.shape, lambda i, n=p.ndim: (0,) * n) for p in fused
    ]

    kernel = functools.partial(nn_kernel,
                               compute_dtype=compute_dtype,
                               act_dtype=act_dtype)

    out = pl.pallas_call(
        kernel,
        out_shape=jax.ShapeDtypeStruct((B, OUT), jnp.float32),
        grid_spec=pl.GridSpec(
            grid=(pl.cdiv(B, tb),),
            in_specs=[pl.BlockSpec((tb, F_IN), lambda i: (i, 0))] + weight_specs,
            out_specs=pl.BlockSpec((tb, OUT), lambda i: (i, 0)),
        ),
        compiler_params=pltpu.CompilerParams(
            dimension_semantics=("parallel",),
            vmem_limit_bytes=32 * 1024 * 1024,
        ),
    )(x, *fused)
    return out


def init_params(key):
    """Deterministic parameters; weights stored as (in, out), biases as (1, out)."""
    def linear(key, fan_in, fan_out):
        kw, kb = jax.random.split(key)
        bound = 1.0 / jnp.sqrt(jnp.float32(fan_in))
        w = jax.random.uniform(kw, (fan_in, fan_out), jnp.float32, -bound, bound)
        b = jax.random.uniform(kb, (1, fan_out), jnp.float32, -bound, bound)
        return w, b

    keys = jax.random.split(key, 7)
    w0a, b0a = linear(keys[0], IN_DIMS[0], HID)
    w0b, b0b = linear(keys[1], HID, HID)
    w1a, b1a = linear(keys[2], IN_DIMS[1], HID)
    w1b, b1b = linear(keys[3], HID, HID)
    w3a, b3a = linear(keys[4], HID * len(IN_DIMS), MID)
    w3b, b3b = linear(keys[5], MID, 32)
    w3c, b3c = linear(keys[6], 32, OUT)
    return (w0a, b0a, w0b, b0b, w1a, b1a, w1b, b1b,
            w3a, b3a, w3b, b3b, w3c, b3c)


def nn_forward_ref(x, params):
    (w0a, b0a, w0b, b0b, w1a, b1a, w1b, b1b,
     w3a, b3a, w3b, b3b, w3c, b3c) = params
    x0 = x[:, :IN_DIMS[0]]
    x1 = x[:, IN_DIMS[0]:]
    h0 = jnp.tanh(jnp.tanh(x0 @ w0a + b0a) @ w0b + b0b)
    h1 = jnp.tanh(jnp.tanh(x1 @ w1a + b1a) @ w1b + b1b)
    h = jnp.concatenate([h0, h1], axis=-1)
    h = jnp.tanh(h @ w3a + b3a)
    h = jnp.tanh(h @ w3b + b3b)
    return h @ w3c + b3c


if __name__ == "__main__":
    key = jax.random.PRNGKey(0)
    kx, kx2, kp = jax.random.split(key, 3)
    params = init_params(kp)

    # 1) Small, block-aligned batch.
    B = 16
    x = jax.random.normal(kx, (B, F_IN), jnp.float32)
    ref = nn_forward_ref(x, params)

    # f32-operand path (default Mosaic f32 matmul lowering, no extra precision
    # flag needed for this tolerance).
    out_f32 = jax.block_until_ready(
        nn_forward(x, params, compute_dtype=jnp.float32))
    assert out_f32.shape == (B, OUT)
    assert jnp.allclose(out_f32, ref, atol=1e-3, rtol=1e-3), "f32 mismatch"

    # Default bf16-operand path (f32 MXU accumulation; bf16 tanh on v6e/v7x).
    out_bf16 = jax.block_until_ready(nn_forward(x, params))
    assert out_bf16.shape == (B, OUT)
    assert jnp.allclose(out_bf16, ref, atol=5e-2, rtol=5e-2), "bf16 mismatch"

    # 2) Ragged batch exercising the masked last block (no wrapper pad).
    B2 = 40
    x2 = jax.random.normal(kx2, (B2, F_IN), jnp.float32)
    ref2 = nn_forward_ref(x2, params)
    out2 = jax.block_until_ready(nn_forward(x2, params, tb=16))
    assert out2.shape == (B2, OUT)
    assert jnp.allclose(out2, ref2, atol=5e-2, rtol=5e-2), "ragged mismatch"

    print("KERNEL_OK")
</pallas_src>

<mosaic_0001>
module attributes {stable_mosaic.version = 11 : i64} {
  func.func @nn_kernel(%arg0: i32, %arg1: memref<16x256xf32, #tpu.memory_space<vmem>>, %arg2: memref<256x256xf32, #tpu.memory_space<vmem>>, %arg3: memref<1x256xf32, #tpu.memory_space<vmem>>, %arg4: memref<256x256xf32, #tpu.memory_space<vmem>>, %arg5: memref<1x256xf32, #tpu.memory_space<vmem>>, %arg6: memref<256x128xf32, #tpu.memory_space<vmem>>, %arg7: memref<1x128xf32, #tpu.memory_space<vmem>>, %arg8: memref<128x32xf32, #tpu.memory_space<vmem>>, %arg9: memref<1x32xf32, #tpu.memory_space<vmem>>, %arg10: memref<1x32xf32, #tpu.memory_space<vmem>>, %arg11: memref<1x1xf32, #tpu.memory_space<vmem>>, %arg12: memref<16x1xf32, #tpu.memory_space<vmem>>) attributes {dimension_semantics = [#tpu.dimension_semantics<parallel>], iteration_bounds = array<i64: 1>, scalar_prefetch = 0 : i64, scratch_operands = 0 : i64, tpu.core_type = #tpu.core_type<tc>, window_params = [{transform_indices = @transform_0, window_bounds = array<i64: 16, 256>}, {pipeline_mode = #tpu.pipeline_mode<synchronous>, transform_indices = @transform_1, window_bounds = array<i64: 256, 256>}, {pipeline_mode = #tpu.pipeline_mode<synchronous>, transform_indices = @transform_2, window_bounds = array<i64: 1, 256>}, {pipeline_mode = #tpu.pipeline_mode<synchronous>, transform_indices = @transform_3, window_bounds = array<i64: 256, 256>}, {pipeline_mode = #tpu.pipeline_mode<synchronous>, transform_indices = @transform_4, window_bounds = array<i64: 1, 256>}, {pipeline_mode = #tpu.pipeline_mode<synchronous>, transform_indices = @transform_5, window_bounds = array<i64: 256, 128>}, {pipeline_mode = #tpu.pipeline_mode<synchronous>, transform_indices = @transform_6, window_bounds = array<i64: 1, 128>}, {pipeline_mode = #tpu.pipeline_mode<synchronous>, transform_indices = @transform_7, window_bounds = array<i64: 128, 32>}, {pipeline_mode = #tpu.pipeline_mode<synchronous>, transform_indices = @transform_8, window_bounds = array<i64: 1, 32>}, {pipeline_mode = #tpu.pipeline_mode<synchronous>, transform_indices = @transform_9, window_bounds = array<i64: 1, 32>}, {pipeline_mode = #tpu.pipeline_mode<synchronous>, transform_indices = @transform_10, window_bounds = array<i64: 1, 1>}, {transform_indices = @transform_11, window_bounds = array<i64: 16, 1>}]} {
    %c0 = arith.constant 0 : index
    %c0_0 = arith.constant 0 : index
    %0 = vector.load %arg1[%c0, %c0_0] : memref<16x256xf32, #tpu.memory_space<vmem>>, vector<16x256xf32>
    %c0_1 = arith.constant 0 : index
    %c0_2 = arith.constant 0 : index
    %1 = vector.load %arg2[%c0_1, %c0_2] : memref<256x256xf32, #tpu.memory_space<vmem>>, vector<256x256xf32>
    %cst = arith.constant dense<0.000000e+00> : vector<16x256xf32>
    %2 = tpu.matmul %0, %1, %cst {dimension_numbers = #tpu.dot_dimension_numbers<[1], [0], [0], [1], [0, 0, 1, 1], [], []>} : vector<16x256xf32>, vector<256x256xf32>, vector<16x256xf32> -> vector<16x256xf32>
    %c0_3 = arith.constant 0 : index
    %c0_4 = arith.constant 0 : index
    %3 = vector.load %arg3[%c0_3, %c0_4] : memref<1x256xf32, #tpu.memory_space<vmem>>, vector<1x256xf32>
    %4 = vector.broadcast %3 : vector<1x256xf32> to vector<16x256xf32>
    %5 = arith.addf %2, %4 : vector<16x256xf32>
    %6 = math.tanh %5 : vector<16x256xf32>
    %c0_5 = arith.constant 0 : index
    %c0_6 = arith.constant 0 : index
    %7 = vector.load %arg4[%c0_5, %c0_6] : memref<256x256xf32, #tpu.memory_space<vmem>>, vector<256x256xf32>
    %cst_7 = arith.constant dense<0.000000e+00> : vector<16x256xf32>
    %8 = tpu.matmul %6, %7, %cst_7 {dimension_numbers = #tpu.dot_dimension_numbers<[1], [0], [0], [1], [0, 0, 1, 1], [], []>} : vector<16x256xf32>, vector<256x256xf32>, vector<16x256xf32> -> vector<16x256xf32>
    %c0_8 = arith.constant 0 : index
    %c0_9 = arith.constant 0 : index
    %9 = vector.load %arg5[%c0_8, %c0_9] : memref<1x256xf32, #tpu.memory_space<vmem>>, vector<1x256xf32>
    %10 = vector.broadcast %9 : vector<1x256xf32> to vector<16x256xf32>
    %11 = arith.addf %8, %10 : vector<16x256xf32>
    %12 = math.tanh %11 : vector<16x256xf32>
    %c0_10 = arith.constant 0 : index
    %c0_11 = arith.constant 0 : index
    %13 = vector.load %arg6[%c0_10, %c0_11] : memref<256x128xf32, #tpu.memory_space<vmem>>, vector<256x128xf32>
    %cst_12 = arith.constant dense<0.000000e+00> : vector<16x128xf32>
    %14 = tpu.matmul %12, %13, %cst_12 {dimension_numbers = #tpu.dot_dimension_numbers<[1], [0], [0], [1], [0, 0, 1, 1], [], []>} : vector<16x256xf32>, vector<256x128xf32>, vector<16x128xf32> -> vector<16x128xf32>
    %c0_13 = arith.constant 0 : index
    %c0_14 = arith.constant 0 : index
    %15 = vector.load %arg7[%c0_13, %c0_14] : memref<1x128xf32, #tpu.memory_space<vmem>>, vector<1x128xf32>
    %16 = vector.broadcast %15 : vector<1x128xf32> to vector<16x128xf32>
    %17 = arith.addf %14, %16 : vector<16x128xf32>
    %18 = math.tanh %17 : vector<16x128xf32>
    %c0_15 = arith.constant 0 : index
    %c0_16 = arith.constant 0 : index
    %19 = vector.load %arg8[%c0_15, %c0_16] : memref<128x32xf32, #tpu.memory_space<vmem>>, vector<128x32xf32>
    %cst_17 = arith.constant dense<0.000000e+00> : vector<16x32xf32>
    %20 = tpu.matmul %18, %19, %cst_17 {dimension_numbers = #tpu.dot_dimension_numbers<[1], [0], [0], [1], [0, 0, 1, 1], [], []>} : vector<16x128xf32>, vector<128x32xf32>, vector<16x32xf32> -> vector<16x32xf32>
    %c0_18 = arith.constant 0 : index
    %c0_19 = arith.constant 0 : index
    %21 = vector.load %arg9[%c0_18, %c0_19] : memref<1x32xf32, #tpu.memory_space<vmem>>, vector<1x32xf32>
    %22 = vector.broadcast %21 : vector<1x32xf32> to vector<16x32xf32>
    %23 = arith.addf %20, %22 : vector<16x32xf32>
    %24 = math.tanh %23 : vector<16x32xf32>
    %c0_20 = arith.constant 0 : index
    %c0_21 = arith.constant 0 : index
    %25 = vector.load %arg10[%c0_20, %c0_21] : memref<1x32xf32, #tpu.memory_space<vmem>>, vector<1x32xf32>
    %26 = vector.broadcast %25 : vector<1x32xf32> to vector<16x32xf32>
    %27 = arith.mulf %24, %26 : vector<16x32xf32>
    %cst_22 = arith.constant dense<0.000000e+00> : vector<16xf32>
    %28 = vector.multi_reduction <add>, %27, %cst_22 [1] : vector<16x32xf32> to vector<16xf32>
    %29 = vector.shape_cast %28 : vector<16xf32> to vector<16x1xf32>
    %c0_23 = arith.constant 0 : index
    %c0_24 = arith.constant 0 : index
    %30 = vector.load %arg11[%c0_23, %c0_24] : memref<1x1xf32, #tpu.memory_space<vmem>>, vector<1x1xf32>
    %31 = vector.broadcast %30 : vector<1x1xf32> to vector<16x1xf32>
    %32 = arith.addf %29, %31 : vector<16x1xf32>
    %c0_25 = arith.constant 0 : index
    %c0_26 = arith.constant 0 : index
    %33 = vector.load %arg12[%c0_25, %c0_26] : memref<16x1xf32, #tpu.memory_space<vmem>>, vector<16x1xf32>
    tpu.vector_store %arg12[%c0_25, %c0_26], %32 {strides = array<i32>} : memref<16x1xf32, #tpu.memory_space<vmem>>, vector<16x1xf32>,
    return
  }
  func.func @transform_0(%arg0: i32) -> (i32, i32) {
    %c0_i32 = arith.constant 0 : i32
    %c0_i32_0 = arith.constant 0 : i32
    return %arg0, %c0_i32 : i32, i32
  }
  func.func @transform_1(%arg0: i32) -> (i32, i32) {
    %c0_i32 = arith.constant 0 : i32
    %c0_i32_0 = arith.constant 0 : i32
    %c0_i32_1 = arith.constant 0 : i32
    return %c0_i32, %c0_i32_0 : i32, i32
  }
  func.func @transform_2(%arg0: i32) -> (i32, i32) {
    %c0_i32 = arith.constant 0 : i32
    %c0_i32_0 = arith.constant 0 : i32
    %c0_i32_1 = arith.constant 0 : i32
    return %c0_i32, %c0_i32_0 : i32, i32
  }
  func.func @transform_3(%arg0: i32) -> (i32, i32) {
    %c0_i32 = arith.constant 0 : i32
    %c0_i32_0 = arith.constant 0 : i32
    %c0_i32_1 = arith.constant 0 : i32
    return %c0_i32, %c0_i32_0 : i32, i32
  }
  func.func @transform_4(%arg0: i32) -> (i32, i32) {
    %c0_i32 = arith.constant 0 : i32
    %c0_i32_0 = arith.constant 0 : i32
    %c0_i32_1 = arith.constant 0 : i32
    return %c0_i32, %c0_i32_0 : i32, i32
  }
  func.func @transform_5(%arg0: i32) -> (i32, i32) {
    %c0_i32 = arith.constant 0 : i32
    %c0_i32_0 = arith.constant 0 : i32
    %c0_i32_1 = arith.constant 0 : i32
    return %c0_i32, %c0_i32_0 : i32, i32
  }
  func.func @transform_6(%arg0: i32) -> (i32, i32) {
    %c0_i32 = arith.constant 0 : i32
    %c0_i32_0 = arith.constant 0 : i32
    %c0_i32_1 = arith.constant 0 : i32
    return %c0_i32, %c0_i32_0 : i32, i32
  }
  func.func @transform_7(%arg0: i32) -> (i32, i32) {
    %c0_i32 = arith.constant 0 : i32
    %c0_i32_0 = arith.constant 0 : i32
    %c0_i32_1 = arith.constant 0 : i32
    return %c0_i32, %c0_i32_0 : i32, i32
  }
  func.func @transform_8(%arg0: i32) -> (i32, i32) {
    %c0_i32 = arith.constant 0 : i32
    %c0_i32_0 = arith.constant 0 : i32
    %c0_i32_1 = arith.constant 0 : i32
    return %c0_i32, %c0_i32_0 : i32, i32
  }
  func.func @transform_9(%arg0: i32) -> (i32, i32) {
    %c0_i32 = arith.constant 0 : i32
    %c0_i32_0 = arith.constant 0 : i32
    %c0_i32_1 = arith.constant 0 : i32
    return %c0_i32, %c0_i32_0 : i32, i32
  }
  func.func @transform_10(%arg0: i32) -> (i32, i32) {
    %c0_i32 = arith.constant 0 : i32
    %c0_i32_0 = arith.constant 0 : i32
    %c0_i32_1 = arith.constant 0 : i32
    return %c0_i32, %c0_i32_0 : i32, i32
  }
  func.func @transform_11(%arg0: i32) -> (i32, i32) {
    %c0_i32 = arith.constant 0 : i32
    %c0_i32_0 = arith.constant 0 : i32
    return %arg0, %c0_i32 : i32, i32
  }
}

</mosaic_0001>

<llo_original>
// kernel: tpu_custom_call.1
$region0: #{tpu_custom_call.1}
  #allocation0 [shape = 'u32[]', space=smem, size = 0x4, offset = 0x4, fixed_abs, tag = 'smem constant byte address 0x4 - core index']
  #allocation1 [shape = 'u32[144,128]{1,0:T(1,128)}', space=vmem, size = 0x12000, scoped, tag = 'internal scratch']
  #allocation2 [shape = 'f32[1,1]{1,0:T(1,128)S(1)}', space=vmem, size = 0x200, scoped, tag = 'scoped memory for tpu_custom_call.1']
  %s0 = inlined_call_operand.vmem [shape: f32[16,256], index: 0, kind: input, shape index: {}]
  %s1 = inlined_call_operand.hbm [shape: f32[256,256], index: 1, kind: input, shape index: {}]
  %s2 = inlined_call_operand.vmem [shape: f32[1,256], index: 2, kind: input, shape index: {}]
  %s3 = inlined_call_operand.hbm [shape: f32[256,256], index: 3, kind: input, shape index: {}]
  %s4 = inlined_call_operand.vmem [shape: f32[1,256], index: 4, kind: input, shape index: {}]
  %s5 = inlined_call_operand.hbm [shape: f32[256,128], index: 5, kind: input, shape index: {}]
  %s6 = inlined_call_operand.vmem [shape: f32[1,128], index: 6, kind: input, shape index: {}]
  %s7 = inlined_call_operand.vmem [shape: f32[128,32], index: 7, kind: input, shape index: {}]
  %s8 = inlined_call_operand.vmem [shape: f32[1,32], index: 8, kind: input, shape index: {}]
  %s9 = inlined_call_operand.vmem [shape: f32[1,32], index: 9, kind: input, shape index: {}]
  %s10 = inlined_call_operand.<no memory space> [shape: f32[1,1], index: 10, kind: input, shape index: {}]
  %s11 = inlined_call_operand.vmem [shape: f32[16,1], index: 11, kind: output, shape index: {}]
  %s12 = sld [smem:[#allocation0]]
  $region66: #{tpu_custom_call.1} parent=0
    _
  %s14 = ssub.s32 1, %s12
  %s15 = scalar_select 0, %s14, %s12
  %v16 = vstv %s10
  %17 = vst [vmem:[#allocation2] sm:$0x1] %v16
  $region1: #{tpu_custom_call.1} parent=0
    #allocation3 [shape = 'u8[262144]{0}', space=vmem, size = 0x40000, scoped, tag = 'input window, operand 1, single buffered']
    #allocation4 [shape = 's32[1]{0}', space=sflag, size = 0x4, scoped, tag = 'scoped memory for tpu_custom_call.1']
    #allocation5 [shape = 'u8[262144]{0}', space=vmem, size = 0x40000, scoped, tag = 'input window, operand 3, single buffered']
    #allocation6 [shape = 's32[1]{0}', space=sflag, size = 0x4, scoped, tag = 'scoped memory for tpu_custom_call.1']
    #allocation7 [shape = 'u8[131072]{0}', space=vmem, size = 0x20000, scoped, tag = 'input window, operand 5, single buffered']
    %18 = vsyncpa [#allocation4], 0
    %19 = vsyncpa [#allocation6], 0
    // Predicated region
    $region2: #{tpu_custom_call.1} parent=1 // pred_check
      _
    $region3: #{tpu_custom_call.1} parent=1 // pred_check_branch
      %21 = sbr.rel (0) target = $region5
    $region4: #{tpu_custom_call.1} parent=1 // pred_region
      _
    $region5: #{tpu_custom_call.1} parent=1 // pred_fallthru
      _
    // Predicated region
    $region6: #{tpu_custom_call.1} parent=1 // pred_check
      _
    $region7: #{tpu_custom_call.1} parent=1 // pred_check_branch
      %23 = sbr.rel (0) target = $region9
    $region8: #{tpu_custom_call.1} parent=1 // pred_region
      %s25 = ssub.s32 8192, 8192
      %26 = vsyncadd [#allocation4], %s25
      %s27 = sshll.u32 [#allocation3], 4
      %s28 = int_to_ptr.vmem [resolvable:$true] %s27
      %33 = dma.hbm_to_vmem [thread:$0]  %s1, 8192, %s28, [#allocation4], 256, 256, 16
    $region9: #{tpu_custom_call.1} parent=1 // pred_fallthru
      _
    // Predicated region
    $region10: #{tpu_custom_call.1} parent=1 // pred_check
      _
    $region11: #{tpu_custom_call.1} parent=1 // pred_check_branch
      %35 = sbr.rel (0) target = $region13
    $region12: #{tpu_custom_call.1} parent=1 // pred_region
      _
    $region13: #{tpu_custom_call.1} parent=1 // pred_fallthru
      _
    // Predicated region
    $region14: #{tpu_custom_call.1} parent=1 // pred_check
      _
    $region15: #{tpu_custom_call.1} parent=1 // pred_check_branch
      %37 = sbr.rel (0) target = $region17
    $region16: #{tpu_custom_call.1} parent=1 // pred_region
      %s39 = ssub.s32 8192, 8192
      %40 = vsyncadd [#allocation6], %s39
      %s41 = sshll.u32 [#allocation5], 4
      %s42 = int_to_ptr.vmem [resolvable:$true] %s41
      %47 = dma.hbm_to_vmem [thread:$0]  %s3, 8192, %s42, [#allocation6], 256, 256, 16
    $region17: #{tpu_custom_call.1} parent=1 // pred_fallthru
      _
    // Predicated region
    $region18: #{tpu_custom_call.1} parent=1 // pred_check
      _
    $region19: #{tpu_custom_call.1} parent=1 // pred_check_branch
      %49 = sbr.rel (0) target = $region21
    $region20: #{tpu_custom_call.1} parent=1 // pred_region
      _
    $region21: #{tpu_custom_call.1} parent=1 // pred_fallthru
      _
    // Predicated region
    $region22: #{tpu_custom_call.1} parent=1 // pred_check
      _
    $region23: #{tpu_custom_call.1} parent=1 // pred_check_branch
      %51 = sbr.rel (0) target = $region25
    $region24: #{tpu_custom_call.1} parent=1 // pred_region
      %s53 = ssub.s32 4096, 4096
      %54 = vsyncadd [#allocation6], %s53
      %s55 = sshll.u32 [#allocation7], 4
      %s56 = int_to_ptr.vmem [resolvable:$true] %s55
      %61 = dma.hbm_to_vmem [thread:$0]  %s5, 4096, %s56, [#allocation6], 128, 128, 8
    $region25: #{tpu_custom_call.1} parent=1 // pred_fallthru
      _
    // Predicated region
    $region26: #{tpu_custom_call.1} parent=1 // pred_check
      _
    $region27: #{tpu_custom_call.1} parent=1 // pred_check_branch
      %63 = sbr.rel (0) target = $region29
    $region28: #{tpu_custom_call.1} parent=1 // pred_region
      _
    $region29: #{tpu_custom_call.1} parent=1 // pred_fallthru
      _
    // Predicated region
    $region30: #{tpu_custom_call.1} parent=1 // pred_check
      _
    $region31: #{tpu_custom_call.1} parent=1 // pred_check_branch
      %65 = sbr.rel (0) target = $region33
    $region32: #{tpu_custom_call.1} parent=1 // pred_region
      _
    $region33: #{tpu_custom_call.1} parent=1 // pred_fallthru
      _
    // Predicated region
    $region34: #{tpu_custom_call.1} parent=1 // pred_check
      _
    $region35: #{tpu_custom_call.1} parent=1 // pred_check_branch
      %67 = sbr.rel (0) target = $region37
    $region36: #{tpu_custom_call.1} parent=1 // pred_region
      _
    $region37: #{tpu_custom_call.1} parent=1 // pred_fallthru
      _
    // Predicated region
    $region38: #{tpu_custom_call.1} parent=1 // pred_check
      _
    $region39: #{tpu_custom_call.1} parent=1 // pred_check_branch
      %69 = sbr.rel (0) target = $region41
    $region40: #{tpu_custom_call.1} parent=1 // pred_region
      _
    $region41: #{tpu_custom_call.1} parent=1 // pred_fallthru
      _
    // Predicated region
    $region42: #{tpu_custom_call.1} parent=1 // pred_check
      _
    $region43: #{tpu_custom_call.1} parent=1 // pred_check_branch
      %71 = sbr.rel (0) target = $region45
    $region44: #{tpu_custom_call.1} parent=1 // pred_region
      _
    $region45: #{tpu_custom_call.1} parent=1 // pred_fallthru
      _
    // Predicated region
    $region46: #{tpu_custom_call.1} parent=1 // pred_check
      _
    $region47: #{tpu_custom_call.1} parent=1 // pred_check_branch
      %73 = sbr.rel (0) target = $region49
    $region48: #{tpu_custom_call.1} parent=1 // pred_region
      %74 = dma.done [#allocation4], 8192
    $region49: #{tpu_custom_call.1} parent=1 // pred_fallthru
      _
    // Predicated region
    $region50: #{tpu_custom_call.1} parent=1 // pred_check
      _
    $region51: #{tpu_custom_call.1} parent=1 // pred_check_branch
      %76 = sbr.rel (0) target = $region53
    $region52: #{tpu_custom_call.1} parent=1 // pred_region
      %77 = dma.done [#allocation6], 8192
    $region53: #{tpu_custom_call.1} parent=1 // pred_fallthru
      _
    // Predicated region
    $region54: #{tpu_custom_call.1} parent=1 // pred_check
      _
    $region55: #{tpu_custom_call.1} parent=1 // pred_check_branch
      %79 = sbr.rel (0) target = $region57
    $region56: #{tpu_custom_call.1} parent=1 // pred_region
      %80 = dma.done [#allocation6], 4096
    $region57: #{tpu_custom_call.1} parent=1 // pred_fallthru
      _
    %v81 = vld [vmem:[%s0] sm:$0xff]
    %v82 = vld [vmem:[%s0 + $0x8] sm:$0xff]
    %v83 = vld [vmem:[%s0 + $0x10] sm:$0xff]
    %v84 = vld [vmem:[%s0 + $0x18] sm:$0xff]
    %v85 = vld [vmem:[#allocation3] sm:$0xff]
    %v86 = vld [vmem:[#allocation3 + $0x8] sm:$0xff]
    %v87 = vld [vmem:[#allocation3 + $0x10] sm:$0xff]
    %v88 = vld [vmem:[#allocation3 + $0x18] sm:$0xff]
    %v89 = vld [vmem:[#allocation3 + $0x20] sm:$0xff]
    %v90 = vld [vmem:[#allocation3 + $0x28] sm:$0xff]
    %v91 = vld [vmem:[#allocation3 + $0x30] sm:$0xff]
    %v92 = vld [vmem:[#allocation3 + $0x38] sm:$0xff]
    %v93 = vld [vmem:[#allocation3 + $0x40] sm:$0xff]
    %v94 = vld [vmem:[#allocation3 + $0x48] sm:$0xff]
    %v95 = vld [vmem:[#allocation3 + $0x50] sm:$0xff]
    %v96 = vld [vmem:[#allocation3 + $0x58] sm:$0xff]
    %v97 = vld [vmem:[#allocation3 + $0x60] sm:$0xff]
    %v98 = vld [vmem:[#allocation3 + $0x68] sm:$0xff]
    %v99 = vld [vmem:[#allocation3 + $0x70] sm:$0xff]
    %v100 = vld [vmem:[#allocation3 + $0x78] sm:$0xff]
    %v101 = vld [vmem:[#allocation3 + $0x80] sm:$0xff]
    %v102 = vld [vmem:[#allocation3 + $0x88] sm:$0xff]
    %v103 = vld [vmem:[#allocation3 + $0x90] sm:$0xff]
    %v104 = vld [vmem:[#allocation3 + $0x98] sm:$0xff]
    %v105 = vld [vmem:[#allocation3 + $0xa0] sm:$0xff]
    %v106 = vld [vmem:[#allocation3 + $0xa8] sm:$0xff]
    %v107 = vld [vmem:[#allocation3 + $0xb0] sm:$0xff]
    %v108 = vld [vmem:[#allocation3 + $0xb8] sm:$0xff]
    %v109 = vld [vmem:[#allocation3 + $0xc0] sm:$0xff]
    %v110 = vld [vmem:[#allocation3 + $0xc8] sm:$0xff]
    %v111 = vld [vmem:[#allocation3 + $0xd0] sm:$0xff]
    %v112 = vld [vmem:[#allocation3 + $0xd8] sm:$0xff]
    %v113 = vld [vmem:[#allocation3 + $0xe0] sm:$0xff]
    %v114 = vld [vmem:[#allocation3 + $0xe8] sm:$0xff]
    %v115 = vld [vmem:[#allocation3 + $0xf0] sm:$0xff]
    %v116 = vld [vmem:[#allocation3 + $0xf8] sm:$0xff]
    %v117 = vld [vmem:[#allocation3 + $0x100] sm:$0xff]
    %v118 = vld [vmem:[#allocation3 + $0x108] sm:$0xff]
    %v119 = vld [vmem:[#allocation3 + $0x110] sm:$0xff]
    %v120 = vld [vmem:[#allocation3 + $0x118] sm:$0xff]
    %v121 = vld [vmem:[#allocation3 + $0x120] sm:$0xff]
    %v122 = vld [vmem:[#allocation3 + $0x128] sm:$0xff]
    %v123 = vld [vmem:[#allocation3 + $0x130] sm:$0xff]
    %v124 = vld [vmem:[#allocation3 + $0x138] sm:$0xff]
    %v125 = vld [vmem:[#allocation3 + $0x140] sm:$0xff]
    %v126 = vld [vmem:[#allocation3 + $0x148] sm:$0xff]
    %v127 = vld [vmem:[#allocation3 + $0x150] sm:$0xff]
    %v128 = vld [vmem:[#allocation3 + $0x158] sm:$0xff]
    %v129 = vld [vmem:[#allocation3 + $0x160] sm:$0xff]
    %v130 = vld [vmem:[#allocation3 + $0x168] sm:$0xff]
    %v131 = vld [vmem:[#allocation3 + $0x170] sm:$0xff]
    %v132 = vld [vmem:[#allocation3 + $0x178] sm:$0xff]
    %v133 = vld [vmem:[#allocation3 + $0x180] sm:$0xff]
    %v134 = vld [vmem:[#allocation3 + $0x188] sm:$0xff]
    %v135 = vld [vmem:[#allocation3 + $0x190] sm:$0xff]
    %v136 = vld [vmem:[#allocation3 + $0x198] sm:$0xff]
    %v137 = vld [vmem:[#allocation3 + $0x1a0] sm:$0xff]
    %v138 = vld [vmem:[#allocation3 + $0x1a8] sm:$0xff]
    %v139 = vld [vmem:[#allocation3 + $0x1b0] sm:$0xff]
    %v140 = vld [vmem:[#allocation3 + $0x1b8] sm:$0xff]
    %v141 = vld [vmem:[#allocation3 + $0x1c0] sm:$0xff]
    %v142 = vld [vmem:[#allocation3 + $0x1c8] sm:$0xff]
    %v143 = vld [vmem:[#allocation3 + $0x1d0] sm:$0xff]
    %v144 = vld [vmem:[#allocation3 + $0x1d8] sm:$0xff]
    %v145 = vld [vmem:[#allocation3 + $0x1e0] sm:$0xff]
    %v146 = vld [vmem:[#allocation3 + $0x1e8] sm:$0xff]
    %v147 = vld [vmem:[#allocation3 + $0x1f0] sm:$0xff]
    %v148 = vld [vmem:[#allocation3 + $0x1f8] sm:$0xff]
    %v149 = vld [vmem:[%s2] sm:$0x3]
    %v151 = vlaneseq
    %v152 = vshrl.u32 %v151, 7
    %v153 = vsub.s32 0, %v152
    %v154 = vrot.slane %v149, %v153
    %v155 = vlaneseq
    %v156 = vshrl.u32 %v155, 7
    %v157 = vsub.s32 1, %v156
    %v158 = vrot.slane %v149, %v157
    %161 = vmatprep.subr.mxu0 %v86
    %162 = vmatpush1.msra.mxu0 %v85
    %163 = vmatprep.subr.mxu0 %v88
    %164 = vmatpush1.msra.mxu0 %v87
    %165 = vmatprep.subr.mxu0 %v90
    %166 = vmatpush1.msra.mxu0 %v89
    %167 = vmatprep.subr.mxu0 %v92
    %168 = vmatpush1.msra.mxu0 %v91
    %169 = vmatprep.subr.mxu0 %v94
    %170 = vmatpush1.msra.mxu0 %v93
    %171 = vmatprep.subr.mxu0 %v96
    %172 = vmatpush1.msra.mxu0 %v95
    %173 = vmatprep.subr.mxu0 %v98
    %174 = vmatpush1.msra.mxu0 %v97
    %175 = vmatprep.subr.mxu0 %v100
    %176 = vmatpush1.msra.mxu0 %v99
    %177 = vmatprep.subr.mxu0 %v102
    %178 = vmatpush1.msra.mxu0 %v101
    %179 = vmatprep.subr.mxu0 %v104
    %180 = vmatpush1.msra.mxu0 %v103
    %181 = vmatprep.subr.mxu0 %v106
    %182 = vmatpush1.msra.mxu0 %v105
    %183 = vmatprep.subr.mxu0 %v108
    %184 = vmatpush1.msra.mxu0 %v107
    %185 = vmatprep.subr.mxu0 %v110
    %186 = vmatpush1.msra.mxu0 %v109
    %187 = vmatprep.subr.mxu0 %v112
    %188 = vmatpush1.msra.mxu0 %v111
    %189 = vmatprep.subr.mxu0 %v114
    %190 = vmatpush1.msra.mxu0 %v113
    %191 = vmatprep.subr.mxu0 %v116
    %192 = vmatpush1.msra.mxu0 %v115
    %193 = vmatprep.subr.mxu0 %v118
    %194 = vmatpush1.msra.mxu0 %v117
    %195 = vmatprep.subr.mxu0 %v120
    %196 = vmatpush1.msra.mxu0 %v119
    %197 = vmatprep.subr.mxu0 %v122
    %198 = vmatpush1.msra.mxu0 %v121
    %199 = vmatprep.subr.mxu0 %v124
    %200 = vmatpush1.msra.mxu0 %v123
    %201 = vmatprep.subr.mxu0 %v126
    %202 = vmatpush1.msra.mxu0 %v125
    %203 = vmatprep.subr.mxu0 %v128
    %204 = vmatpush1.msra.mxu0 %v127
    %205 = vmatprep.subr.mxu0 %v130
    %206 = vmatpush1.msra.mxu0 %v129
    %207 = vmatprep.subr.mxu0 %v132
    %208 = vmatpush1.msra.mxu0 %v131
    %209 = vmatprep.subr.mxu0 %v134
    %210 = vmatpush1.msra.mxu0 %v133
    %211 = vmatprep.subr.mxu0 %v136
    %212 = vmatpush1.msra.mxu0 %v135
    %213 = vmatprep.subr.mxu0 %v138
    %214 = vmatpush1.msra.mxu0 %v137
    %215 = vmatprep.subr.mxu0 %v140
    %216 = vmatpush1.msra.mxu0 %v139
    %217 = vmatprep.subr.mxu0 %v142
    %218 = vmatpush1.msra.mxu0 %v141
    %219 = vmatprep.subr.mxu0 %v144
    %220 = vmatpush1.msra.mxu0 %v143
    %221 = vmatprep.subr.mxu0 %v146
    %222 = vmatpush1.msra.mxu0 %v145
    %223 = vmatprep.subr.mxu0 %v148
    %224 = vmatpush1.msra.mxu0 %v147
    %225 = vmatprep.mubr.f32.mxu0 %v82
    %226 = vmatmul.mubr.f32.gmra.mrb[0].mxu0 %v81
    %v227 = vpop.f32.mrb[0].mxu0
    %v228 = vadd.f32 %v154, %v227
    %v229 = vpop.f32.mrb[0].mxu0
    %v230 = vadd.f32 %v158, %v229
    %231 = vmatprep.mubr.f32.mxu0 %v84
    %232 = vmatmul.mubr.f32.gmra.mrb[0].mxu0 %v83
    %v233 = vpop.f32.mrb[0].mxu0
    %v234 = vadd.f32 %v154, %v233
    %v235 = vpop.f32.mrb[0].mxu0
    %v236 = vadd.f32 %v158, %v235
    %237 = vdwg.mxu0
    %v238 = vtanh.pop %v228
    %v239 = vtanh.pop %v230
    %v240 = vtanh.pop %v234
    %v241 = vtanh.pop %v236
    %v242 = vld [vmem:[#allocation5] sm:$0xff]
    %v243 = vld [vmem:[#allocation5 + $0x8] sm:$0xff]
    %v244 = vld [vmem:[#allocation5 + $0x10] sm:$0xff]
    %v245 = vld [vmem:[#allocation5 + $0x18] sm:$0xff]
    %v246 = vld [vmem:[#allocation5 + $0x20] sm:$0xff]
    %v247 = vld [vmem:[#allocation5 + $0x28] sm:$0xff]
    %v248 = vld [vmem:[#allocation5 + $0x30] sm:$0xff]
    %v249 = vld [vmem:[#allocation5 + $0x38] sm:$0xff]
    %v250 = vld [vmem:[#allocation5 + $0x40] sm:$0xff]
    %v251 = vld [vmem:[#allocation5 + $0x48] sm:$0xff]
    %v252 = vld [vmem:[#allocation5 + $0x50] sm:$0xff]
    %v253 = vld [vmem:[#allocation5 + $0x58] sm:$0xff]
    %v254 = vld [vmem:[#allocation5 + $0x60] sm:$0xff]
    %v255 = vld [vmem:[#allocation5 + $0x68] sm:$0xff]
    %v256 = vld [vmem:[#allocation5 + $0x70] sm:$0xff]
    %v257 = vld [vmem:[#allocation5 + $0x78] sm:$0xff]
    %v258 = vld [vmem:[#allocation5 + $0x80] sm:$0xff]
    %v259 = vld [vmem:[#allocation5 + $0x88] sm:$0xff]
    %v260 = vld [vmem:[#allocation5 + $0x90] sm:$0xff]
    %v261 = vld [vmem:[#allocation5 + $0x98] sm:$0xff]
    %v262 = vld [vmem:[#allocation5 + $0xa0] sm:$0xff]
    %v263 = vld [vmem:[#allocation5 + $0xa8] sm:$0xff]
    %v264 = vld [vmem:[#allocation5 + $0xb0] sm:$0xff]
    %v265 = vld [vmem:[#allocation5 + $0xb8] sm:$0xff]
    %v266 = vld [vmem:[#allocation5 + $0xc0] sm:$0xff]
    %v267 = vld [vmem:[#allocation5 + $0xc8] sm:$0xff]
    %v268 = vld [vmem:[#allocation5 + $0xd0] sm:$0xff]
    %v269 = vld [vmem:[#allocation5 + $0xd8] sm:$0xff]
    %v270 = vld [vmem:[#allocation5 + $0xe0] sm:$0xff]
    %v271 = vld [vmem:[#allocation5 + $0xe8] sm:$0xff]
    %v272 = vld [vmem:[#allocation5 + $0xf0] sm:$0xff]
    %v273 = vld [vmem:[#allocation5 + $0xf8] sm:$0xff]
    %v274 = vld [vmem:[#allocation5 + $0x100] sm:$0xff]
    %v275 = vld [vmem:[#allocation5 + $0x108] sm:$0xff]
    %v276 = vld [vmem:[#allocation5 + $0x110] sm:$0xff]
    %v277 = vld [vmem:[#allocation5 + $0x118] sm:$0xff]
    %v278 = vld [vmem:[#allocation5 + $0x120] sm:$0xff]
    %v279 = vld [vmem:[#allocation5 + $0x128] sm:$0xff]
    %v280 = vld [vmem:[#allocation5 + $0x130] sm:$0xff]
    %v281 = vld [vmem:[#allocation5 + $0x138] sm:$0xff]
    %v282 = vld [vmem:[#allocation5 + $0x140] sm:$0xff]
    %v283 = vld [vmem:[#allocation5 + $0x148] sm:$0xff]
    %v284 = vld [vmem:[#allocation5 + $0x150] sm:$0xff]
    %v285 = vld [vmem:[#allocation5 + $0x158] sm:$0xff]
    %v286 = vld [vmem:[#allocation5 + $0x160] sm:$0xff]
    %v287 = vld [vmem:[#allocation5 + $0x168] sm:$0xff]
    %v288 = vld [vmem:[#allocation5 + $0x170] sm:$0xff]
    %v289 = vld [vmem:[#allocation5 + $0x178] sm:$0xff]
    %v290 = vld [vmem:[#allocation5 + $0x180] sm:$0xff]
    %v291 = vld [vmem:[#allocation5 + $0x188] sm:$0xff]
    %v292 = vld [vmem:[#allocation5 + $0x190] sm:$0xff]
    %v293 = vld [vmem:[#allocation5 + $0x198] sm:$0xff]
    %v294 = vld [vmem:[#allocation5 + $0x1a0] sm:$0xff]
    %v295 = vld [vmem:[#allocation5 + $0x1a8] sm:$0xff]
    %v296 = vld [vmem:[#allocation5 + $0x1b0] sm:$0xff]
    %v297 = vld [vmem:[#allocation5 + $0x1b8] sm:$0xff]
    %v298 = vld [vmem:[#allocation5 + $0x1c0] sm:$0xff]
    %v299 = vld [vmem:[#allocation5 + $0x1c8] sm:$0xff]
    %v300 = vld [vmem:[#allocation5 + $0x1d0] sm:$0xff]
    %v301 = vld [vmem:[#allocation5 + $0x1d8] sm:$0xff]
    %v302 = vld [vmem:[#allocation5 + $0x1e0] sm:$0xff]
    %v303 = vld [vmem:[#allocation5 + $0x1e8] sm:$0xff]
    %v304 = vld [vmem:[#allocation5 + $0x1f0] sm:$0xff]
    %v305 = vld [vmem:[#allocation5 + $0x1f8] sm:$0xff]
    %v306 = vld [vmem:[%s4] sm:$0x3]
    %v308 = vlaneseq
    %v309 = vshrl.u32 %v308, 7
    %v310 = vsub.s32 0, %v309
    %v311 = vrot.slane %v306, %v310
    %v312 = vlaneseq
    %v313 = vshrl.u32 %v312, 7
    %v314 = vsub.s32 1, %v313
    %v315 = vrot.slane %v306, %v314
    %318 = vmatprep.subr.mxu0 %v243
    %319 = vmatpush1.msra.mxu0 %v242
    %320 = vmatprep.subr.mxu0 %v245
    %321 = vmatpush1.msra.mxu0 %v244
    %322 = vmatprep.subr.mxu0 %v247
    %323 = vmatpush1.msra.mxu0 %v246
    %324 = vmatprep.subr.mxu0 %v249
    %325 = vmatpush1.msra.mxu0 %v248
    %326 = vmatprep.subr.mxu0 %v251
    %327 = vmatpush1.msra.mxu0 %v250
    %328 = vmatprep.subr.mxu0 %v253
    %329 = vmatpush1.msra.mxu0 %v252
    %330 = vmatprep.subr.mxu0 %v255
    %331 = vmatpush1.msra.mxu0 %v254
    %332 = vmatprep.subr.mxu0 %v257
    %333 = vmatpush1.msra.mxu0 %v256
    %334 = vmatprep.subr.mxu0 %v259
    %335 = vmatpush1.msra.mxu0 %v258
    %336 = vmatprep.subr.mxu0 %v261
    %337 = vmatpush1.msra.mxu0 %v260
    %338 = vmatprep.subr.mxu0 %v263
    %339 = vmatpush1.msra.mxu0 %v262
    %340 = vmatprep.subr.mxu0 %v265
    %341 = vmatpush1.msra.mxu0 %v264
    %342 = vmatprep.subr.mxu0 %v267
    %343 = vmatpush1.msra.mxu0 %v266
    %344 = vmatprep.subr.mxu0 %v269
    %345 = vmatpush1.msra.mxu0 %v268
    %346 = vmatprep.subr.mxu0 %v271
    %347 = vmatpush1.msra.mxu0 %v270
    %348 = vmatprep.subr.mxu0 %v273
    %349 = vmatpush1.msra.mxu0 %v272
    %350 = vmatprep.subr.mxu0 %v275
    %351 = vmatpush1.msra.mxu0 %v274
    %352 = vmatprep.subr.mxu0 %v277
    %353 = vmatpush1.msra.mxu0 %v276
    %354 = vmatprep.subr.mxu0 %v279
    %355 = vmatpush1.msra.mxu0 %v278
    %356 = vmatprep.subr.mxu0 %v281
    %357 = vmatpush1.msra.mxu0 %v280
    %358 = vmatprep.subr.mxu0 %v283
    %359 = vmatpush1.msra.mxu0 %v282
    %360 = vmatprep.subr.mxu0 %v285
    %361 = vmatpush1.msra.mxu0 %v284
    %362 = vmatprep.subr.mxu0 %v287
    %363 = vmatpush1.msra.mxu0 %v286
    %364 = vmatprep.subr.mxu0 %v289
    %365 = vmatpush1.msra.mxu0 %v288
    %366 = vmatprep.subr.mxu0 %v291
    %367 = vmatpush1.msra.mxu0 %v290
    %368 = vmatprep.subr.mxu0 %v293
    %369 = vmatpush1.msra.mxu0 %v292
    %370 = vmatprep.subr.mxu0 %v295
    %371 = vmatpush1.msra.mxu0 %v294
    %372 = vmatprep.subr.mxu0 %v297
    %373 = vmatpush1.msra.mxu0 %v296
    %374 = vmatprep.subr.mxu0 %v299
    %375 = vmatpush1.msra.mxu0 %v298
    %376 = vmatprep.subr.mxu0 %v301
    %377 = vmatpush1.msra.mxu0 %v300
    %378 = vmatprep.subr.mxu0 %v303
    %379 = vmatpush1.msra.mxu0 %v302
    %380 = vmatprep.subr.mxu0 %v305
    %381 = vmatpush1.msra.mxu0 %v304
    %382 = vmatprep.mubr.f32.mxu0 %v239
    %383 = vmatmul.mubr.f32.gmra.mrb[0].mxu0 %v238
    %v384 = vpop.f32.mrb[0].mxu0
    %v385 = vadd.f32 %v311, %v384
    %v386 = vpop.f32.mrb[0].mxu0
    %v387 = vadd.f32 %v315, %v386
    %388 = vmatprep.mubr.f32.mxu0 %v241
    %389 = vmatmul.mubr.f32.gmra.mrb[0].mxu0 %v240
    %v390 = vpop.f32.mrb[0].mxu0
    %v391 = vadd.f32 %v311, %v390
    %v392 = vpop.f32.mrb[0].mxu0
    %v393 = vadd.f32 %v315, %v392
    %394 = vdwg.mxu0
    %v395 = vtanh.pop %v385
    %v396 = vtanh.pop %v387
    %v397 = vtanh.pop %v391
    %v398 = vtanh.pop %v393
    %v399 = vld [vmem:[#allocation7] sm:$0xff]
    %v400 = vld [vmem:[#allocation7 + $0x8] sm:$0xff]
    %v401 = vld [vmem:[#allocation7 + $0x10] sm:$0xff]
    %v402 = vld [vmem:[#allocation7 + $0x18] sm:$0xff]
    %v403 = vld [vmem:[#allocation7 + $0x20] sm:$0xff]
    %v404 = vld [vmem:[#allocation7 + $0x28] sm:$0xff]
    %v405 = vld [vmem:[#allocation7 + $0x30] sm:$0xff]
    %v406 = vld [vmem:[#allocation7 + $0x38] sm:$0xff]
    %v407 = vld [vmem:[#allocation7 + $0x40] sm:$0xff]
    %v408 = vld [vmem:[#allocation7 + $0x48] sm:$0xff]
    %v409 = vld [vmem:[#allocation7 + $0x50] sm:$0xff]
    %v410 = vld [vmem:[#allocation7 + $0x58] sm:$0xff]
    %v411 = vld [vmem:[#allocation7 + $0x60] sm:$0xff]
    %v412 = vld [vmem:[#allocation7 + $0x68] sm:$0xff]
    %v413 = vld [vmem:[#allocation7 + $0x70] sm:$0xff]
    %v414 = vld [vmem:[#allocation7 + $0x78] sm:$0xff]
    %v415 = vld [vmem:[#allocation7 + $0x80] sm:$0xff]
    %v416 = vld [vmem:[#allocation7 + $0x88] sm:$0xff]
    %v417 = vld [vmem:[#allocation7 + $0x90] sm:$0xff]
    %v418 = vld [vmem:[#allocation7 + $0x98] sm:$0xff]
    %v419 = vld [vmem:[#allocation7 + $0xa0] sm:$0xff]
    %v420 = vld [vmem:[#allocation7 + $0xa8] sm:$0xff]
    %v421 = vld [vmem:[#allocation7 + $0xb0] sm:$0xff]
    %v422 = vld [vmem:[#allocation7 + $0xb8] sm:$0xff]
    %v423 = vld [vmem:[#allocation7 + $0xc0] sm:$0xff]
    %v424 = vld [vmem:[#allocation7 + $0xc8] sm:$0xff]
    %v425 = vld [vmem:[#allocation7 + $0xd0] sm:$0xff]
    %v426 = vld [vmem:[#allocation7 + $0xd8] sm:$0xff]
    %v427 = vld [vmem:[#allocation7 + $0xe0] sm:$0xff]
    %v428 = vld [vmem:[#allocation7 + $0xe8] sm:$0xff]
    %v429 = vld [vmem:[#allocation7 + $0xf0] sm:$0xff]
    %v430 = vld [vmem:[#allocation7 + $0xf8] sm:$0xff]
    %v431 = vld [vmem:[%s6] sm:$0x1]
    %v433 = vlaneseq
    %v434 = vshrl.u32 %v433, 7
    %v435 = vsub.s32 0, %v434
    %v436 = vrot.slane %v431, %v435
    %438 = vmatprep.subr.mxu0 0.0
    %439 = vmatpush1.msra.mxu0 %v399
    %440 = vmatprep.subr.mxu0 0.0
    %441 = vmatpush1.msra.mxu0 %v400
    %442 = vmatprep.subr.mxu0 0.0
    %443 = vmatpush1.msra.mxu0 %v401
    %444 = vmatprep.subr.mxu0 0.0
    %445 = vmatpush1.msra.mxu0 %v402
    %446 = vmatprep.subr.mxu0 0.0
    %447 = vmatpush1.msra.mxu0 %v403
    %448 = vmatprep.subr.mxu0 0.0
    %449 = vmatpush1.msra.mxu0 %v404
    %450 = vmatprep.subr.mxu0 0.0
    %451 = vmatpush1.msra.mxu0 %v405
    %452 = vmatprep.subr.mxu0 0.0
    %453 = vmatpush1.msra.mxu0 %v406
    %454 = vmatprep.subr.mxu0 0.0
    %455 = vmatpush1.msra.mxu0 %v407
    %456 = vmatprep.subr.mxu0 0.0
    %457 = vmatpush1.msra.mxu0 %v408
    %458 = vmatprep.subr.mxu0 0.0
    %459 = vmatpush1.msra.mxu0 %v409
    %460 = vmatprep.subr.mxu0 0.0
    %461 = vmatpush1.msra.mxu0 %v410
    %462 = vmatprep.subr.mxu0 0.0
    %463 = vmatpush1.msra.mxu0 %v411
    %464 = vmatprep.subr.mxu0 0.0
    %465 = vmatpush1.msra.mxu0 %v412
    %466 = vmatprep.subr.mxu0 0.0
    %467 = vmatpush1.msra.mxu0 %v413
    %468 = vmatprep.subr.mxu0 0.0
    %469 = vmatpush1.msra.mxu0 %v414
    %470 = vmatprep.subr.mxu0 0.0
    %471 = vmatpush1.msra.mxu0 %v415
    %472 = vmatprep.subr.mxu0 0.0
    %473 = vmatpush1.msra.mxu0 %v416
    %474 = vmatprep.subr.mxu0 0.0
    %475 = vmatpush1.msra.mxu0 %v417
    %476 = vmatprep.subr.mxu0 0.0
    %477 = vmatpush1.msra.mxu0 %v418
    %478 = vmatprep.subr.mxu0 0.0
    %479 = vmatpush1.msra.mxu0 %v419
    %480 = vmatprep.subr.mxu0 0.0
    %481 = vmatpush1.msra.mxu0 %v420
    %482 = vmatprep.subr.mxu0 0.0
    %483 = vmatpush1.msra.mxu0 %v421
    %484 = vmatprep.subr.mxu0 0.0
    %485 = vmatpush1.msra.mxu0 %v422
    %486 = vmatprep.subr.mxu0 0.0
    %487 = vmatpush1.msra.mxu0 %v423
    %488 = vmatprep.subr.mxu0 0.0
    %489 = vmatpush1.msra.mxu0 %v424
    %490 = vmatprep.subr.mxu0 0.0
    %491 = vmatpush1.msra.mxu0 %v425
    %492 = vmatprep.subr.mxu0 0.0
    %493 = vmatpush1.msra.mxu0 %v426
    %494 = vmatprep.subr.mxu0 0.0
    %495 = vmatpush1.msra.mxu0 %v427
    %496 = vmatprep.subr.mxu0 0.0
    %497 = vmatpush1.msra.mxu0 %v428
    %498 = vmatprep.subr.mxu0 0.0
    %499 = vmatpush1.msra.mxu0 %v429
    %500 = vmatprep.subr.mxu0 0.0
    %501 = vmatpush1.msra.mxu0 %v430
    %502 = vmatprep.mubr.f32.mxu0 %v396
    %503 = vmatmul.mubr.f32.gmra.mrb[0].mxu0 %v395
    %v504 = vpop.f32.mrb[0].mxu0
    %v505 = vadd.f32 %v436, %v504
    %v506 = vpop.f32.mrb[0].mxu0
    %507 = vmatprep.mubr.f32.mxu0 %v398
    %508 = vmatmul.mubr.f32.gmra.mrb[0].mxu0 %v397
    %v509 = vpop.f32.mrb[0].mxu0
    %v510 = vadd.f32 %v436, %v509
    %v511 = vpop.f32.mrb[0].mxu0
    %512 = vdwg.mxu0
    %v513 = vtanh.pop %v505
    %v514 = vtanh.pop %v510
    %v515 = vld [vmem:[%s7] sm:$0xff]
    %v516 = vld [vmem:[%s7 + $0x8] sm:$0xff]
    %v517 = vld [vmem:[%s7 + $0x10] sm:$0xff]
    %v518 = vld [vmem:[%s7 + $0x18] sm:$0xff]
    %v519 = vld [vmem:[%s7 + $0x20] sm:$0xff]
    %v520 = vld [vmem:[%s7 + $0x28] sm:$0xff]
    %v521 = vld [vmem:[%s7 + $0x30] sm:$0xff]
    %v522 = vld [vmem:[%s7 + $0x38] sm:$0xff]
    %v523 = vld [vmem:[%s7 + $0x40] sm:$0xff]
    %v524 = vld [vmem:[%s7 + $0x48] sm:$0xff]
    %v525 = vld [vmem:[%s7 + $0x50] sm:$0xff]
    %v526 = vld [vmem:[%s7 + $0x58] sm:$0xff]
    %v527 = vld [vmem:[%s7 + $0x60] sm:$0xff]
    %v528 = vld [vmem:[%s7 + $0x68] sm:$0xff]
    %v529 = vld [vmem:[%s7 + $0x70] sm:$0xff]
    %v530 = vld [vmem:[%s7 + $0x78] sm:$0xff]
    %v531 = vld [vmem:[%s8] sm:$0x1]
    %v533 = vlaneseq
    %v534 = vshrl.u32 %v533, 7
    %v535 = vsub.s32 0, %v534
    %v536 = vrot.slane %v531, %v535
    %538 = vmatprep.subr.mxu0 0.0
    %539 = vmatpush1.msra.mxu0 %v515
    %540 = vmatprep.subr.mxu0 0.0
    %541 = vmatpush1.msra.mxu0 %v516
    %542 = vmatprep.subr.mxu0 0.0
    %543 = vmatpush1.msra.mxu0 %v517
    %544 = vmatprep.subr.mxu0 0.0
    %545 = vmatpush1.msra.mxu0 %v518
    %546 = vmatprep.subr.mxu0 0.0
    %547 = vmatpush1.msra.mxu0 %v519
    %548 = vmatprep.subr.mxu0 0.0
    %549 = vmatpush1.msra.mxu0 %v520
    %550 = vmatprep.subr.mxu0 0.0
    %551 = vmatpush1.msra.mxu0 %v521
    %552 = vmatprep.subr.mxu0 0.0
    %553 = vmatpush1.msra.mxu0 %v522
    %554 = vmatprep.subr.mxu0 0.0
    %555 = vmatpush1.msra.mxu0 %v523
    %556 = vmatprep.subr.mxu0 0.0
    %557 = vmatpush1.msra.mxu0 %v524
    %558 = vmatprep.subr.mxu0 0.0
    %559 = vmatpush1.msra.mxu0 %v525
    %560 = vmatprep.subr.mxu0 0.0
    %561 = vmatpush1.msra.mxu0 %v526
    %562 = vmatprep.subr.mxu0 0.0
    %563 = vmatpush1.msra.mxu0 %v527
    %564 = vmatprep.subr.mxu0 0.0
    %565 = vmatpush1.msra.mxu0 %v528
    %566 = vmatprep.subr.mxu0 0.0
    %567 = vmatpush1.msra.mxu0 %v529
    %568 = vmatprep.subr.mxu0 0.0
    %569 = vmatpush1.msra.mxu0 %v530
    %570 = vmatprep.subr.mxu0 0.0
    %571 = vmatpush1.msra.mxu0 0.0
    %572 = vmatprep.subr.mxu0 0.0
    %573 = vmatpush1.msra.mxu0 0.0
    %574 = vmatprep.subr.mxu0 0.0
    %575 = vmatpush1.msra.mxu0 0.0
    %576 = vmatprep.subr.mxu0 0.0
    %577 = vmatpush1.msra.mxu0 0.0
    %578 = vmatprep.subr.mxu0 0.0
    %579 = vmatpush1.msra.mxu0 0.0
    %580 = vmatprep.subr.mxu0 0.0
    %581 = vmatpush1.msra.mxu0 0.0
    %582 = vmatprep.subr.mxu0 0.0
    %583 = vmatpush1.msra.mxu0 0.0
    %584 = vmatprep.subr.mxu0 0.0
    %585 = vmatpush1.msra.mxu0 0.0
    %586 = vmatprep.subr.mxu0 0.0
    %587 = vmatpush1.msra.mxu0 0.0
    %588 = vmatprep.subr.mxu0 0.0
    %589 = vmatpush1.msra.mxu0 0.0
    %590 = vmatprep.subr.mxu0 0.0
    %591 = vmatpush1.msra.mxu0 0.0
    %592 = vmatprep.subr.mxu0 0.0
    %593 = vmatpush1.msra.mxu0 0.0
    %594 = vmatprep.subr.mxu0 0.0
    %595 = vmatpush1.msra.mxu0 0.0
    %596 = vmatprep.subr.mxu0 0.0
    %597 = vmatpush1.msra.mxu0 0.0
    %598 = vmatprep.subr.mxu0 0.0
    %599 = vmatpush1.msra.mxu0 0.0
    %600 = vmatprep.subr.mxu0 0.0
    %601 = vmatpush1.msra.mxu0 0.0
    %602 = vmatprep.mubr.f32.mxu0 0.0
    %603 = vmatmul.mubr.f32.gmra.mrb[0].mxu0 %v513
    %v604 = vpop.f32.mrb[0].mxu0
    %v605 = vadd.f32 %v536, %v604
    %v606 = vpop.f32.mrb[0].mxu0
    %607 = vmatprep.mubr.f32.mxu0 0.0
    %608 = vmatmul.mubr.f32.gmra.mrb[0].mxu0 %v514
    %v609 = vpop.f32.mrb[0].mxu0
    %v610 = vadd.f32 %v536, %v609
    %v611 = vpop.f32.mrb[0].mxu0
    %612 = vdwg.mxu0
    %v613 = vtanh.pop %v605
    %v614 = vtanh.pop %v610
    %v615 = vld [vmem:[%s9] sm:$0x1]
    %v617 = vlaneseq
    %v618 = vshrl.u32 %v617, 7
    %v619 = vsub.s32 0, %v618
    %v620 = vrot.slane %v615, %v619
    %v622 = vmul.f32 %v613, %v620
    %v623 = vmul.f32 %v614, %v620
    %vm624 = vcmask 261120
    %v625 = vsel %vm624, %v622, 0.0
    %626 = vadd.xlane.f32.xlu0 %v625
    %v627 = vpop.xlane.xlu0 %626
    %v628 = vsel %vm624, %v623, 0.0
    %629 = vadd.xlane.f32.xlu0 %v628
    %v630 = vpop.xlane.xlu0 %629
    %v631 = vld [vmem:[#allocation2] sm:$0x1]
    %v633 = vlaneseq
    %v634 = vshrl.u32 %v633, 7
    %v635 = vsub.s32 0, %v634
    %v636 = vrot.slane %v631, %v635
    %v638 = vadd.f32 %v627, %v636
    %v639 = vadd.f32 %v630, %v636
    %vm640 = vcmask 7168
    %641 = vst.msk [vmem:[%s11] sm:$0xff] %vm640, %v638
    %642 = vst.msk [vmem:[%s11 + $0x8] sm:$0xff] %vm640, %v639
    // Predicated region
    $region58: #{tpu_custom_call.1} parent=1 // pred_check
      _
    $region59: #{tpu_custom_call.1} parent=1 // pred_check_branch
      %644 = sbr.rel (0) target = $region61
    $region60: #{tpu_custom_call.1} parent=1 // pred_region
      _
    $region61: #{tpu_custom_call.1} parent=1 // pred_fallthru
      _
    // Predicated region
    $region62: #{tpu_custom_call.1} parent=1 // pred_check
      _
    $region63: #{tpu_custom_call.1} parent=1 // pred_check_branch
      %646 = sbr.rel (0) target = $region65
    $region64: #{tpu_custom_call.1} parent=1 // pred_region
      _
    $region65: #{tpu_custom_call.1} parent=1 // pred_fallthru
      _
    %647 = vsyncpa [#allocation4], 1
    %648 = vsyncpa [#allocation6], 1

</llo_original>
